<compile_context>
chip_gen: v6e
topology: v6e:2x2x1
jax: 0.10.0
libtpu: 0.0.40
codegen_flags: <defaults>
</compile_context>

<pallas_src>
import functools

import jax
import jax.numpy as jnp
from jax.experimental import pallas as pl
from jax.experimental.pallas import tpu as pltpu

_LANE = 128
_NB_MAX = 8            # keep the in-kernel unrolled batch loop short
_TARGET_BYTES = 2 << 20   # ~2 MiB streamed per grid step (amortizes step overhead)
_VMEM_BUDGET = 8 << 20    # double-buffered in+out blocks stay under this


def _make_kernel(nb):
    """Fused 1x1 conv + bias + ReLU on one (batch-block, spatial-tile) block.

    x_ref: (NB, Cin, TS)  activations, spatial flattened on the lane axis
    w_ref: (Cout, Cin)    conv weight (VMEM-resident across the grid)
    b_ref: (Cout, 1)      conv bias   (VMEM-resident, f32)
    o_ref: (NB, Cout, TS) output block (lane-dense stores)
    """

    def kernel(x_ref, w_ref, b_ref, o_ref):
        w = w_ref[...]
        bias = b_ref[...]
        # nb is a small static int -> fully unrolled; each iteration is one
        # (Cout, Cin) @ (Cin, TS) MXU dot with an f32 epilogue.
        for i in range(nb):
            y = jnp.dot(w, x_ref[i], preferred_element_type=jnp.float32)
            y = y + bias                              # (Cout, 1) broadcast over lanes
            o_ref[i] = jnp.maximum(y, 0.0).astype(o_ref.dtype)

    return kernel


def _select_tiles(N, Cin, Cout, S, x_bytes, out_bytes):
    """Pick (NB, TS): bytes-targeted, lane-dense, VMEM-safe, megacore-friendly."""
    per_col = Cin * x_bytes + Cout * out_bytes   # streamed bytes per spatial column

    # Spatial tile: multiple of 128 lanes (unmasked vst), sized toward the byte
    # target.  Full-dim exception only when S < 128.
    if S < _LANE:
        ts = S
    else:
        want = max(_LANE, (_TARGET_BYTES // per_col) // _LANE * _LANE)
        s_ceil = pl.cdiv(S, _LANE) * _LANE      # no point exceeding S (rounded up)
        ts = min(want, s_ceil)

    # Batch blocking: small feature maps stream several batches per grid step.
    nb = 1
    if N > 1 and ts * per_col < _TARGET_BYTES:
        nb = min(N, _NB_MAX, max(1, _TARGET_BYTES // (ts * per_col)))

    # Megacore (v7x has 2 TCs over "parallel" axes): avoid a degenerate (1,1) grid.
    if pl.cdiv(N, nb) * pl.cdiv(S, ts) == 1:
        if S >= 2 * _LANE:
            ts = max(_LANE, (S // 2) // _LANE * _LANE)
        elif nb > 1:
            nb = max(1, nb // 2)

    # VMEM guard: double-buffered activation+output blocks stay well under the
    # v5e 16 MiB scoped default and a small fraction of v7x's 64 MiB physical VMEM.
    while 2 * nb * ts * per_col > _VMEM_BUDGET and nb > 1:
        nb //= 2
    while 2 * nb * ts * per_col > _VMEM_BUDGET and ts > _LANE:
        ts = max(_LANE, (ts // 2) // _LANE * _LANE)

    return nb, ts


def conv1x1_relu(x_nchw, w_oi, b):
    """outconv_relu forward via one pallas_call. x_nchw: (N, Cin, H, W)."""
    N, Cin, H, W = x_nchw.shape
    Cout = w_oi.shape[0]
    S = H * W

    x = x_nchw.reshape(N, Cin, S)            # contiguous reshape: no data movement
    out_dtype = x.dtype                       # stream native dtype both ways
    x_bytes = x.dtype.itemsize
    out_bytes = jnp.dtype(out_dtype).itemsize

    # Weights: tiny and VMEM-resident.  Match bf16 activations for the native MXU
    # bf16 path; keep f32 otherwise.  Bias stays f32 for the f32 epilogue.
    if x.dtype == jnp.bfloat16:
        w_k = w_oi.astype(jnp.bfloat16)
    else:
        w_k = w_oi.astype(jnp.float32)
    b2 = b.astype(jnp.float32).reshape(Cout, 1)

    NB, TS = _select_tiles(N, Cin, Cout, S, x_bytes, out_bytes)
    grid = (pl.cdiv(N, NB), pl.cdiv(S, TS))   # ragged last blocks handled by Pallas

    cost = pl.CostEstimate(
        flops=2 * N * Cout * Cin * S,
        transcendentals=0,
        bytes_accessed=(N * S * (Cin * x_bytes + Cout * out_bytes)
                        + Cout * Cin * w_k.dtype.itemsize + Cout * 4),
    )

    out = pl.pallas_call(
        _make_kernel(NB),
        out_shape=jax.ShapeDtypeStruct((N, Cout, S), out_dtype),
        grid=grid,
        in_specs=[
            # Activations: only streaming traffic.  Batch blocked, spatial on lanes.
            pl.BlockSpec((NB, Cin, TS), lambda n, s: (n, 0, s)),
            # Weight / bias: constant index_map -> fetched once, VMEM-resident.
            pl.BlockSpec((Cout, Cin), lambda n, s: (0, 0)),
            pl.BlockSpec((Cout, 1), lambda n, s: (0, 0)),
        ],
        out_specs=pl.BlockSpec((NB, Cout, TS), lambda n, s: (n, 0, s)),
        compiler_params=pltpu.CompilerParams(
            dimension_semantics=("parallel", "parallel"),
            vmem_limit_bytes=32 * 1024 * 1024,
        ),
        cost_estimate=cost,
    )(x, w_k, b2)

    return out.reshape(N, Cout, H, W)


def make_outconv_params(key, in_ch, out_ch):
    """Deterministic synthetic parameters matching nn.Conv2d(in_ch, out_ch, 1)."""
    k1, k2 = jax.random.split(key)
    return {
        "w": 0.1 * jax.random.normal(k1, (out_ch, in_ch, 1, 1), jnp.float32),
        "b": 0.1 * jax.random.normal(k2, (out_ch,), jnp.float32),
    }


@jax.jit
def outconv_relu_forward(x_nchw, params):
    """outconv_relu.forward with default activation=nn.ReLU (inplace is a no-op)."""
    w = params["w"][:, :, 0, 0]              # (Cout, Cin, 1, 1) -> (Cout, Cin)
    return conv1x1_relu(x_nchw, w, params["b"])


def _reference_forward(x_nchw, params):
    """Pure-JAX reference for correctness checking."""
    w = params["w"][:, :, 0, 0]
    y = jnp.einsum("oi,nihw->nohw", w, x_nchw.astype(jnp.float32))
    y = y + params["b"][None, :, None, None]
    return jnp.maximum(y, 0.0)


if __name__ == "__main__":
    key = jax.random.PRNGKey(0)
    kx, kp = jax.random.split(key)

    N, in_ch, H, W = 2, 4, 16, 16
    out_ch = 8
    x = jax.random.normal(kx, (N, in_ch, H, W), jnp.float32)
    params = make_outconv_params(kp, in_ch, out_ch)

    out = jax.block_until_ready(outconv_relu_forward(x, params))
    ref = _reference_forward(x, params)

    assert out.shape == (N, out_ch, H, W)
    assert jnp.allclose(out.astype(jnp.float32), ref, atol=1e-5, rtol=1e-5), \
        "mismatch vs reference"

    print("KERNEL_OK")
</pallas_src>

<mosaic_0001>
module attributes {stable_mosaic.version = 11 : i64} {
  func.func @kernel(%arg0: i32, %arg1: i32, %arg2: memref<2x4x128xf32, #tpu.memory_space<vmem>>, %arg3: memref<8x4xf32, #tpu.memory_space<vmem>>, %arg4: memref<8x1xf32, #tpu.memory_space<vmem>>, %arg5: memref<2x8x128xf32, #tpu.memory_space<vmem>>) attributes {dimension_semantics = [#tpu.dimension_semantics<parallel>, #tpu.dimension_semantics<parallel>], iteration_bounds = array<i64: 1, 2>, scalar_prefetch = 0 : i64, scratch_operands = 0 : i64, tpu.core_type = #tpu.core_type<tc>, window_params = [{transform_indices = @transform_0, window_bounds = array<i64: 2, 4, 128>}, {pipeline_mode = #tpu.pipeline_mode<synchronous>, transform_indices = @transform_1, window_bounds = array<i64: 8, 4>}, {pipeline_mode = #tpu.pipeline_mode<synchronous>, transform_indices = @transform_2, window_bounds = array<i64: 8, 1>}, {transform_indices = @transform_3, window_bounds = array<i64: 2, 8, 128>}]} {
    %c0 = arith.constant 0 : index
    %c0_0 = arith.constant 0 : index
    %0 = vector.load %arg3[%c0, %c0_0] : memref<8x4xf32, #tpu.memory_space<vmem>>, vector<8x4xf32>
    %c0_1 = arith.constant 0 : index
    %c0_2 = arith.constant 0 : index
    %1 = vector.load %arg4[%c0_1, %c0_2] : memref<8x1xf32, #tpu.memory_space<vmem>>, vector<8x1xf32>
    %c0_3 = arith.constant 0 : index
    %c0_4 = arith.constant 0 : index
    %c0_5 = arith.constant 0 : index
    %2 = vector.load %arg2[%c0_3, %c0_4, %c0_5] : memref<2x4x128xf32, #tpu.memory_space<vmem>>, vector<1x4x128xf32>
    %3 = vector.shape_cast %2 : vector<1x4x128xf32> to vector<4x128xf32>
    %cst = arith.constant dense<0.000000e+00> : vector<8x128xf32>
    %4 = tpu.matmul %0, %3, %cst {dimension_numbers = #tpu.dot_dimension_numbers<[1], [0], [0], [1], [0, 0, 1, 1], [], []>} : vector<8x4xf32>, vector<4x128xf32>, vector<8x128xf32> -> vector<8x128xf32>
    %5 = vector.broadcast %1 : vector<8x1xf32> to vector<8x128xf32>
    %6 = arith.addf %4, %5 : vector<8x128xf32>
    %cst_6 = arith.constant 0.000000e+00 : f32
    %7 = vector.broadcast %cst_6 : f32 to vector<8x128xf32>
    %8 = arith.maximumf %6, %7 : vector<8x128xf32>
    %c0_7 = arith.constant 0 : index
    %c0_8 = arith.constant 0 : index
    %c0_9 = arith.constant 0 : index
    %9 = vector.load %arg5[%c0_7, %c0_8, %c0_9] : memref<2x8x128xf32, #tpu.memory_space<vmem>>, vector<1x8x128xf32>
    %10 = vector.shape_cast %9 : vector<1x8x128xf32> to vector<8x128xf32>
    %11 = vector.shape_cast %8 : vector<8x128xf32> to vector<1x8x128xf32>
    tpu.vector_store %arg5[%c0_7, %c0_8, %c0_9], %11 {strides = array<i32>} : memref<2x8x128xf32, #tpu.memory_space<vmem>>, vector<1x8x128xf32>,
    %c1 = arith.constant 1 : index
    %c0_10 = arith.constant 0 : index
    %c0_11 = arith.constant 0 : index
    %12 = vector.load %arg2[%c1, %c0_10, %c0_11] : memref<2x4x128xf32, #tpu.memory_space<vmem>>, vector<1x4x128xf32>
    %13 = vector.shape_cast %12 : vector<1x4x128xf32> to vector<4x128xf32>
    %cst_12 = arith.constant dense<0.000000e+00> : vector<8x128xf32>
    %14 = tpu.matmul %0, %13, %cst_12 {dimension_numbers = #tpu.dot_dimension_numbers<[1], [0], [0], [1], [0, 0, 1, 1], [], []>} : vector<8x4xf32>, vector<4x128xf32>, vector<8x128xf32> -> vector<8x128xf32>
    %15 = vector.broadcast %1 : vector<8x1xf32> to vector<8x128xf32>
    %16 = arith.addf %14, %15 : vector<8x128xf32>
    %cst_13 = arith.constant 0.000000e+00 : f32
    %17 = vector.broadcast %cst_13 : f32 to vector<8x128xf32>
    %18 = arith.maximumf %16, %17 : vector<8x128xf32>
    %c1_14 = arith.constant 1 : index
    %c0_15 = arith.constant 0 : index
    %c0_16 = arith.constant 0 : index
    %19 = vector.load %arg5[%c1_14, %c0_15, %c0_16] : memref<2x8x128xf32, #tpu.memory_space<vmem>>, vector<1x8x128xf32>
    %20 = vector.shape_cast %19 : vector<1x8x128xf32> to vector<8x128xf32>
    %21 = vector.shape_cast %18 : vector<8x128xf32> to vector<1x8x128xf32>
    tpu.vector_store %arg5[%c1_14, %c0_15, %c0_16], %21 {strides = array<i32>} : memref<2x8x128xf32, #tpu.memory_space<vmem>>, vector<1x8x128xf32>,
    return
  }
  func.func @transform_0(%arg0: i32, %arg1: i32) -> (i32, i32, i32) {
    %c0_i32 = arith.constant 0 : i32
    %c0_i32_0 = arith.constant 0 : i32
    return %arg0, %c0_i32, %arg1 : i32, i32, i32
  }
  func.func @transform_1(%arg0: i32, %arg1: i32) -> (i32, i32) {
    %c0_i32 = arith.constant 0 : i32
    %c0_i32_0 = arith.constant 0 : i32
    %c0_i32_1 = arith.constant 0 : i32
    return %c0_i32, %c0_i32_0 : i32, i32
  }
  func.func @transform_2(%arg0: i32, %arg1: i32) -> (i32, i32) {
    %c0_i32 = arith.constant 0 : i32
    %c0_i32_0 = arith.constant 0 : i32
    %c0_i32_1 = arith.constant 0 : i32
    return %c0_i32, %c0_i32_0 : i32, i32
  }
  func.func @transform_3(%arg0: i32, %arg1: i32) -> (i32, i32, i32) {
    %c0_i32 = arith.constant 0 : i32
    %c0_i32_0 = arith.constant 0 : i32
    return %arg0, %c0_i32, %arg1 : i32, i32, i32
  }
}

</mosaic_0001>

<llo_original>
// kernel: outconv_relu_forward.1
$region0: #{outconv_relu_forward.1}
  #allocation0 [shape = 'u32[]', space=smem, size = 0x4, offset = 0x4, fixed_abs, tag = 'smem constant byte address 0x4 - core index']
  #allocation1 [shape = 'u32[144,128]{1,0:T(1,128)}', space=vmem, size = 0x12000, scoped, tag = 'internal scratch']
  %s0 = inlined_call_operand.vmem [shape: f32[2,4,256], index: 0, kind: input, shape index: {}]
  %s1 = inlined_call_operand.vmem [shape: f32[8,4], index: 1, kind: input, shape index: {}]
  %s2 = inlined_call_operand.vmem [shape: f32[8,1], index: 2, kind: input, shape index: {}]
  %s3 = inlined_call_operand.vmem [shape: f32[2,8,256], index: 3, kind: output, shape index: {}]
  %s4 = sld [smem:[#allocation0]]
  $region120: #{outconv_relu_forward.1} parent=0
    _
  %s6 = ssub.s32 1, %s4
  %s7 = scalar_select 0, %s6, %s4
  $region1: #{outconv_relu_forward.1} parent=0
    #allocation2 [shape = 'u8[8192]{0}', space=vmem, size = 0x2000, scoped, tag = 'input window, operand 0']
    #allocation3 [shape = 'u8[16384]{0}', space=vmem, size = 0x4000, scoped, tag = 'output window, operand 0']
    loop: start=0, step=1, limit=4
    $region2: #{outconv_relu_forward.1} parent=1 // loop_pre_header
      _
    $region3: #{outconv_relu_forward.1} parent=1 // loop_header
      %s9 = sphi 0, %s13
      %p10 = scmp.ge.s32.totalorder %s9, 4
      %s16 = sphi 0, %s28
      %s17 = sphi 0, %s24
      %s18 = sphi 0, %s16
      %s19 = sphi 0, %s17
      %s20 = sphi 0, %s18
      %s21 = sphi 0, %s19
      %s33 = sphi 0, %s35
      %s36 = sphi 0, %s33
      %s37 = sphi 0, %s36
      %s53 = sphi 0, %s37
      %s57 = sphi 0, %s57
      %s59 = sphi 0, %s57
      %s60 = sphi 0, %s59
      %s74 = sphi 0, %s60
      %s78 = sphi 0, %s78
      %s80 = sphi 0, %s78
      %s81 = sphi 0, %s80
      %s95 = sphi 0, %s81
      %s103 = sphi 0, %s105
      %s106 = sphi 0, %s103
      %s107 = sphi 0, %s106
      %s123 = sphi 0, %s107
    $region4: #{outconv_relu_forward.1} parent=1 // loop_header_branch
      %12 = sbr.rel (%p10) target = $region8
    $region5: #{outconv_relu_forward.1} parent=1 // loop_body
      %s14 = ssub.s32 %s9, 1
      %s15 = ssub.s32 %s9, 2
      %s22 = sadd.s32 1, %s17
      %p23 = scmp.ge.s32.totalorder %s22, 2
      %s24 = scalar_select %p23, 0, %s22
      %s25 = sadd.s32 1, %s16
      %s26 = scalar_select %p23, %s25, %s16
      %p27 = scmp.ge.s32.totalorder %s26, 1
      %s28 = scalar_select %p27, 0, %s26
      %s29 = ssub.s32 %s16, %s28
      %s30 = ssub.s32 %s17, %s24
      %s31 = sor.u32 %s29, %s30
      %p32 = scmp.eq.s32.totalorder %s31, 0
      %s34 = sadd.s32 %s33, 1
      %s35 = scalar_select %p32, %s33, %s34
      %p38 = pneg %p32
      %p39 = scmp.eq.s32.totalorder %s9, 1
      %p40 = por %p38, %p39
      %p41 = scmp.ne.s32.totalorder %s33, %s36
      %p42 = scmp.eq.s32.totalorder %s9, 0
      %p43 = por %p41, %p42
      %p44 = scmp.ne.s32.totalorder %s33, %s36
      %p45 = scmp.eq.s32.totalorder %s14, 1
      %p46 = por %p44, %p45
      %p47 = scmp.ne.s32.totalorder %s36, %s37
      %p48 = scmp.eq.s32.totalorder %s14, 0
      %p49 = por %p47, %p48
      %p50 = scmp.ne.s32.totalorder %s36, %s37
      %p51 = scmp.eq.s32.totalorder %s15, 1
      %p52 = por %p50, %p51
      %p54 = scmp.ne.s32.totalorder %s37, %s53
      %p55 = scmp.eq.s32.totalorder %s15, 0
      %p56 = por %p54, %p55
      %s58 = sadd.s32 %s57, 1
      %p61 = scmp.eq.s32.totalorder %s9, 1
      %p62 = scmp.ne.s32.totalorder %s57, %s59
      %p63 = scmp.eq.s32.totalorder %s9, 0
      %p64 = por %p62, %p63
      %p65 = scmp.ne.s32.totalorder %s57, %s59
      %p66 = scmp.eq.s32.totalorder %s14, 1
      %p67 = por %p65, %p66
      %p68 = scmp.ne.s32.totalorder %s59, %s60
      %p69 = scmp.eq.s32.totalorder %s14, 0
      %p70 = por %p68, %p69
      %p71 = scmp.ne.s32.totalorder %s59, %s60
      %p72 = scmp.eq.s32.totalorder %s15, 1
      %p73 = por %p71, %p72
      %p75 = scmp.ne.s32.totalorder %s60, %s74
      %p76 = scmp.eq.s32.totalorder %s15, 0
      %p77 = por %p75, %p76
      %s79 = sadd.s32 %s78, 1
      %p82 = scmp.eq.s32.totalorder %s9, 1
      %p83 = scmp.ne.s32.totalorder %s78, %s80
      %p84 = scmp.eq.s32.totalorder %s9, 0
      %p85 = por %p83, %p84
      %p86 = scmp.ne.s32.totalorder %s78, %s80
      %p87 = scmp.eq.s32.totalorder %s14, 1
      %p88 = por %p86, %p87
      %p89 = scmp.ne.s32.totalorder %s80, %s81
      %p90 = scmp.eq.s32.totalorder %s14, 0
      %p91 = por %p89, %p90
      %p92 = scmp.ne.s32.totalorder %s80, %s81
      %p93 = scmp.eq.s32.totalorder %s15, 1
      %p94 = por %p92, %p93
      %p96 = scmp.ne.s32.totalorder %s81, %s95
      %p97 = scmp.eq.s32.totalorder %s15, 0
      %p98 = por %p96, %p97
      %s99 = ssub.s32 %s16, %s28
      %s100 = ssub.s32 %s17, %s24
      %s101 = sor.u32 %s99, %s100
      %p102 = scmp.eq.s32.totalorder %s101, 0
      %s104 = sadd.s32 %s103, 1
      %s105 = scalar_select %p102, %s103, %s104
      %p108 = pneg %p102
      %p109 = scmp.eq.s32.totalorder %s9, 1
      %p110 = por %p108, %p109
      %p111 = scmp.ne.s32.totalorder %s103, %s106
      %p112 = scmp.eq.s32.totalorder %s9, 0
      %p113 = por %p111, %p112
      %p114 = scmp.ne.s32.totalorder %s103, %s106
      %p115 = scmp.eq.s32.totalorder %s14, 1
      %p116 = por %p114, %p115
      %p117 = scmp.ne.s32.totalorder %s106, %s107
      %p118 = scmp.eq.s32.totalorder %s14, 0
      %p119 = por %p117, %p118
      %p120 = scmp.ne.s32.totalorder %s106, %s107
      %p121 = scmp.eq.s32.totalorder %s15, 1
      %p122 = por %p120, %p121
      %p124 = scmp.ne.s32.totalorder %s107, %s123
      %p125 = scmp.eq.s32.totalorder %s15, 0
      %p126 = por %p124, %p125
      %p127 = scmp.le.s32.totalorder 1, %s9
      %p128 = scmp.lt.s32.totalorder %s9, 3
      %p129 = pnand %p127, %p128
      %p130 = pneg %p129
      // Predicated region
      $region9: #{outconv_relu_forward.1} parent=5 // pred_check
        _
      $region10: #{outconv_relu_forward.1} parent=5 // pred_check_branch
        %132 = sbr.rel (%p129) target = $region12
      $region11: #{outconv_relu_forward.1} parent=5 // pred_region
        %s133 = ssub.s32 %s9, 1
        // Predicated region
        $region13: #{outconv_relu_forward.1} parent=11 // pred_check
          %p134 = pneg %p70
        $region14: #{outconv_relu_forward.1} parent=11 // pred_check_branch
          %136 = sbr.rel (%p134) target = $region16
        $region15: #{outconv_relu_forward.1} parent=11 // pred_region
          _
        $region16: #{outconv_relu_forward.1} parent=11 // pred_fallthru
          _
        // Predicated region
        $region17: #{outconv_relu_forward.1} parent=11 // pred_check
          %p137 = pneg %p91
        $region18: #{outconv_relu_forward.1} parent=11 // pred_check_branch
          %139 = sbr.rel (%p137) target = $region20
        $region19: #{outconv_relu_forward.1} parent=11 // pred_region
          _
        $region20: #{outconv_relu_forward.1} parent=11 // pred_fallthru
          _
      $region12: #{outconv_relu_forward.1} parent=5 // pred_fallthru
        _
      %p140 = scmp.lt.s32.totalorder %s9, 2
      // Predicated region
      $region21: #{outconv_relu_forward.1} parent=5 // pred_check
        %p141 = pneg %p140
      $region22: #{outconv_relu_forward.1} parent=5 // pred_check_branch
        %143 = sbr.rel (%p141) target = $region24
      $region23: #{outconv_relu_forward.1} parent=5 // pred_region
        // Predicated region
        $region25: #{outconv_relu_forward.1} parent=23 // pred_check
          %p144 = pneg %p43
        $region26: #{outconv_relu_forward.1} parent=23 // pred_check_branch
          %146 = sbr.rel (%p144) target = $region28
        $region27: #{outconv_relu_forward.1} parent=23 // pred_region
          %s147 = sand.u32 %s33, 1
          %s148 = sand.u32 %s33, 1
          %s149 = smul.addr %s148, 8
          %s150 = scalar_lea.vmem [#allocation2], %s149
          %s151 = smul.u32 2, %s16
          %s152 = smul.addr %s151, 2
          %s153 = sadd.s32 %s17, %s152
          %s154 = smul.addr %s153, 4
          %s155 = scalar_lea.vmem %s0, %s154
          // Predicated region
          $region29: #{outconv_relu_forward.1} parent=27 // pred_check
            _
          $region30: #{outconv_relu_forward.1} parent=27 // pred_check_branch
            %157 = sbr.rel (0) target = $region32
          $region31: #{outconv_relu_forward.1} parent=27 // pred_region
            // Predicated region
            $region33: #{outconv_relu_forward.1} parent=31 // pred_check
              _
            $region34: #{outconv_relu_forward.1} parent=31 // pred_check_branch
              %159 = sbr.rel target = $region36
            $region35: #{outconv_relu_forward.1} parent=31 // pred_region
              // Predicated region
              $region48: #{outconv_relu_forward.1} parent=35 // pred_check
                _
              $region49: #{outconv_relu_forward.1} parent=35 // pred_check_branch
                %177 = sbr.rel (0) target = $region51
              $region50: #{outconv_relu_forward.1} parent=35 // pred_region
                loop: start=0, step=1, limit=1
                $region52: #{outconv_relu_forward.1} parent=50 // loop_pre_header
                  _
                $region53: #{outconv_relu_forward.1} parent=50 // loop_header
                  %s179 = sphi 0, %s183
                  %p180 = scmp.ge.s32.totalorder %s179, 1
                  %s184 = sphi %s155, %s155
                  %s185 = sphi %s150, %s150
                $region54: #{outconv_relu_forward.1} parent=50 // loop_header_branch
                  %182 = sbr.rel (%p180) target = $region58
                $region55: #{outconv_relu_forward.1} parent=50 // loop_body
                  _
                $region56: #{outconv_relu_forward.1} parent=50 // loop_footer
                  %s183 = sadd.s32 1, %s179
                $region57: #{outconv_relu_forward.1} parent=50 // loop_footer_branch
                  %178 = sbr.rel target = $region53
                $region58: #{outconv_relu_forward.1} parent=50 // loop_exit
                  _
                %s187 = ssub.s32 16, 1
                loop: start=0, step=1, limit=1
                $region59: #{outconv_relu_forward.1} parent=50 // loop_pre_header
                  _
                $region60: #{outconv_relu_forward.1} parent=50 // loop_header
                  %s189 = sphi 0, %s193
                  %p190 = scmp.ge.s32.totalorder %s189, 1
                  %s194 = sphi %s155, %s155
                  %s195 = sphi %s150, %s150
                $region61: #{outconv_relu_forward.1} parent=50 // loop_header_branch
                  %192 = sbr.rel (%p190) target = $region65
                $region62: #{outconv_relu_forward.1} parent=50 // loop_body
                  %v196 = vld [vmem:[%s194] sm:%s187]
                  %197 = vst [vmem:[%s195] sm:%s187] %v196
                  %v198 = vld [vmem:[%s194 + $0x8] sm:%s187]
                  %199 = vst [vmem:[%s195 + $0x4] sm:%s187] %v198
                $region63: #{outconv_relu_forward.1} parent=50 // loop_footer
                  %s193 = sadd.s32 1, %s189
                $region64: #{outconv_relu_forward.1} parent=50 // loop_footer_branch
                  %188 = sbr.rel target = $region60
                $region65: #{outconv_relu_forward.1} parent=50 // loop_exit
                  _
              $region51: #{outconv_relu_forward.1} parent=35 // pred_fallthru
                _
            $region36: #{outconv_relu_forward.1} parent=31 // pred_fallthru
              _
            // Predicated region
            $region37: #{outconv_relu_forward.1} parent=31 // pred_check
              _
            $region38: #{outconv_relu_forward.1} parent=31 // pred_check_branch
              %161 = sbr.rel (0) target = $region40
            $region39: #{outconv_relu_forward.1} parent=31 // pred_region
              %s163 = ssub.s32 16, 1
              loop: start=0, step=1, limit=1
              $region41: #{outconv_relu_forward.1} parent=39 // loop_pre_header
                _
              $region42: #{outconv_relu_forward.1} parent=39 // loop_header
                %s165 = sphi 0, %s169
                %p166 = scmp.ge.s32.totalorder %s165, 1
                %s170 = sphi %s155, %s155
                %s171 = sphi %s150, %s150
              $region43: #{outconv_relu_forward.1} parent=39 // loop_header_branch
                %168 = sbr.rel (%p166) target = $region47
              $region44: #{outconv_relu_forward.1} parent=39 // loop_body
                %v172 = vld [vmem:[%s170] sm:%s163]
                %173 = vst [vmem:[%s171] sm:%s163] %v172
                %v174 = vld [vmem:[%s170 + $0x8] sm:%s163]
                %175 = vst [vmem:[%s171 + $0x4] sm:%s163] %v174
              $region45: #{outconv_relu_forward.1} parent=39 // loop_footer
                %s169 = sadd.s32 1, %s165
              $region46: #{outconv_relu_forward.1} parent=39 // loop_footer_branch
                %164 = sbr.rel target = $region42
              $region47: #{outconv_relu_forward.1} parent=39 // loop_exit
                _
            $region40: #{outconv_relu_forward.1} parent=31 // pred_fallthru
              _
          $region32: #{outconv_relu_forward.1} parent=27 // pred_fallthru
            _
          %200 = vnop
        $region28: #{outconv_relu_forward.1} parent=23 // pred_fallthru
          _
      $region24: #{outconv_relu_forward.1} parent=5 // pred_fallthru
        _
      %p201 = scmp.le.s32.totalorder 1, %s9
      %p202 = scmp.lt.s32.totalorder %s9, 3
      %p203 = pnand %p201, %p202
      %p204 = pneg %p203
      // Predicated region
      $region66: #{outconv_relu_forward.1} parent=5 // pred_check
        _
      $region67: #{outconv_relu_forward.1} parent=5 // pred_check_branch
        %206 = sbr.rel (%p203) target = $region69
      $region68: #{outconv_relu_forward.1} parent=5 // pred_region
        %s207 = ssub.s32 %s9, 1
        %s208 = sand.u32 %s36, 1
        %s209 = sand.u32 %s36, 1
        %s210 = smul.addr %s209, 8
        %s211 = scalar_lea.vmem [#allocation2], %s210
        // Predicated region
        $region70: #{outconv_relu_forward.1} parent=68 // pred_check
          %p212 = pneg %p49
        $region71: #{outconv_relu_forward.1} parent=68 // pred_check_branch
          %214 = sbr.rel (%p212) target = $region73
        $region72: #{outconv_relu_forward.1} parent=68 // pred_region
          _
        $region73: #{outconv_relu_forward.1} parent=68 // pred_fallthru
          _
        %s215 = sand.u32 %s36, 1
        %s216 = sand.u32 %s36, 1
        %s217 = smul.addr %s216, 8
        %s218 = scalar_lea.vmem [#allocation2], %s217
        %p219 = pneg %p49
        %p220 = pneg %p46
        %p221 = pneg %p70
        %p222 = pneg %p67
        %p223 = pneg %p91
        %p224 = pneg %p88
        %p225 = pneg %p119
        %p226 = pneg %p116
        %s227 = sand.u32 %s106, 1
        %s228 = sand.u32 %s106, 1
        %s229 = smul.addr %s228, 16
        %s230 = scalar_lea.vmem [#allocation3], %s229
        %s231 = smul.u32 2, %s18
        %s232 = smul.u32 2, %s18
        %v233 = vld [vmem:[%s1] sm:$0xff]
        %v234 = vld [vmem:[%s2] sm:$0xff]
        %v235 = vld [vmem:[%s211] sm:$0xf]
        %237 = vset.pattern.permute.xlu0 0
        %238 = vperm.xlu0 %237, %v234
        %v239 = vpop.permute.xlu0 %238
        %vm241 = vcmask 31744
        %v243 = vsel %vm241, %v233, 0
        %vm245 = vcmask 1043456
        %v247 = vsel %vm245, %v235, 0
        %249 = vmatprep.subr.mxu0 0.0
        %250 = vmatpush1.msra.mxu0 0.0
        %251 = vmatprep.subr.mxu0 0.0
        %252 = vmatpush1.msra.mxu0 0.0
        %253 = vmatprep.subr.mxu0 0.0
        %254 = vmatpush1.msra.mxu0 0.0
        %255 = vmatprep.subr.mxu0 0.0
        %256 = vmatpush1.msra.mxu0 0.0
        %257 = vmatprep.subr.mxu0 0.0
        %258 = vmatpush1.msra.mxu0 0.0
        %259 = vmatprep.subr.mxu0 0.0
        %260 = vmatpush1.msra.mxu0 0.0
        %261 = vmatprep.subr.mxu0 0.0
        %262 = vmatpush1.msra.mxu0 0.0
        %263 = vmatprep.subr.mxu0 0.0
        %264 = vmatpush1.msra.mxu0 0.0
        %265 = vmatprep.subr.mxu0 0.0
        %266 = vmatpush1.msra.mxu0 0.0
        %267 = vmatprep.subr.mxu0 0.0
        %268 = vmatpush1.msra.mxu0 0.0
        %269 = vmatprep.subr.mxu0 0.0
        %270 = vmatpush1.msra.mxu0 0.0
        %271 = vmatprep.subr.mxu0 0.0
        %272 = vmatpush1.msra.mxu0 0.0
        %273 = vmatprep.subr.mxu0 0.0
        %274 = vmatpush1.msra.mxu0 0.0
        %275 = vmatprep.subr.mxu0 0.0
        %276 = vmatpush1.msra.mxu0 0.0
        %277 = vmatprep.subr.mxu0 0.0
        %278 = vmatpush1.msra.mxu0 0.0
        %279 = vmatprep.subr.mxu0 0.0
        %280 = vmatpush1.msra.mxu0 %v247
        %281 = vmatprep.subr.mxu0 0.0
        %282 = vmatpush2.msra.mxu0 0.0
        %283 = vmatprep.subr.mxu0 0.0
        %284 = vmatpush2.msra.mxu0 0.0
        %285 = vmatprep.subr.mxu0 0.0
        %286 = vmatpush2.msra.mxu0 0.0
        %287 = vmatprep.subr.mxu0 0.0
        %288 = vmatpush2.msra.mxu0 0.0
        %289 = vmatprep.subr.mxu0 0.0
        %290 = vmatpush2.msra.mxu0 0.0
        %291 = vmatprep.subr.mxu0 0.0
        %292 = vmatpush2.msra.mxu0 0.0
        %293 = vmatprep.subr.mxu0 0.0
        %294 = vmatpush2.msra.mxu0 0.0
        %295 = vmatprep.subr.mxu0 0.0
        %296 = vmatpush2.msra.mxu0 0.0
        %297 = vmatprep.subr.mxu0 0.0
        %298 = vmatpush2.msra.mxu0 0.0
        %299 = vmatprep.subr.mxu0 0.0
        %300 = vmatpush2.msra.mxu0 0.0
        %301 = vmatprep.subr.mxu0 0.0
        %302 = vmatpush2.msra.mxu0 0.0
        %303 = vmatprep.subr.mxu0 0.0
        %304 = vmatpush2.msra.mxu0 0.0
        %305 = vmatprep.subr.mxu0 0.0
        %306 = vmatpush2.msra.mxu0 0.0
        %307 = vmatprep.subr.mxu0 0.0
        %308 = vmatpush2.msra.mxu0 0.0
        %309 = vmatprep.subr.mxu0 0.0
        %310 = vmatpush2.msra.mxu0 0.0
        %311 = vmatprep.subr.mxu0 0.0
        %312 = vmatpush2.msra.mxu0 0.0
        %313 = vmatprep.mubr.f32.mxu0 0.0
        %314 = vmatmul.mubr.f32.gmra.mxu0 %v243
        %v315 = vpop.f32.mrf.mxu0
        %v316 = vadd.f32 %v239, %v315
        %v317 = vpop.f32.mrf.mxu0
        %318 = vdwg.mxu0
        %v319 = vmax.f32 %v316, 0.0
        %320 = vst [vmem:[%s230] sm:$0xff] %v319
        %s321 = scalar_lea.vmem %s211, 4 [#allocation2]
        %v322 = vld [vmem:[%s321] sm:$0xf]
        %v324 = vsel %vm245, %v322, 0
        %326 = vmatprep.subr.mxu0 0.0
        %327 = vmatpush1.msra.mxu0 0.0
        %328 = vmatprep.subr.mxu0 0.0
        %329 = vmatpush1.msra.mxu0 0.0
        %330 = vmatprep.subr.mxu0 0.0
        %331 = vmatpush1.msra.mxu0 0.0
        %332 = vmatprep.subr.mxu0 0.0
        %333 = vmatpush1.msra.mxu0 0.0
        %334 = vmatprep.subr.mxu0 0.0
        %335 = vmatpush1.msra.mxu0 0.0
        %336 = vmatprep.subr.mxu0 0.0
        %337 = vmatpush1.msra.mxu0 0.0
        %338 = vmatprep.subr.mxu0 0.0
        %339 = vmatpush1.msra.mxu0 0.0
        %340 = vmatprep.subr.mxu0 0.0
        %341 = vmatpush1.msra.mxu0 0.0
        %342 = vmatprep.subr.mxu0 0.0
        %343 = vmatpush1.msra.mxu0 0.0
        %344 = vmatprep.subr.mxu0 0.0
        %345 = vmatpush1.msra.mxu0 0.0
        %346 = vmatprep.subr.mxu0 0.0
        %347 = vmatpush1.msra.mxu0 0.0
        %348 = vmatprep.subr.mxu0 0.0
        %349 = vmatpush1.msra.mxu0 0.0
        %350 = vmatprep.subr.mxu0 0.0
        %351 = vmatpush1.msra.mxu0 0.0
        %352 = vmatprep.subr.mxu0 0.0
        %353 = vmatpush1.msra.mxu0 0.0
        %354 = vmatprep.subr.mxu0 0.0
        %355 = vmatpush1.msra.mxu0 0.0
        %356 = vmatprep.subr.mxu0 0.0
        %357 = vmatpush1.msra.mxu0 %v324
        %358 = vmatprep.subr.mxu0 0.0
        %359 = vmatpush2.msra.mxu0 0.0
        %360 = vmatprep.subr.mxu0 0.0
        %361 = vmatpush2.msra.mxu0 0.0
        %362 = vmatprep.subr.mxu0 0.0
        %363 = vmatpush2.msra.mxu0 0.0
        %364 = vmatprep.subr.mxu0 0.0
        %365 = vmatpush2.msra.mxu0 0.0
        %366 = vmatprep.subr.mxu0 0.0
        %367 = vmatpush2.msra.mxu0 0.0
        %368 = vmatprep.subr.mxu0 0.0
        %369 = vmatpush2.msra.mxu0 0.0
        %370 = vmatprep.subr.mxu0 0.0
        %371 = vmatpush2.msra.mxu0 0.0
        %372 = vmatprep.subr.mxu0 0.0
        %373 = vmatpush2.msra.mxu0 0.0
        %374 = vmatprep.subr.mxu0 0.0
        %375 = vmatpush2.msra.mxu0 0.0
        %376 = vmatprep.subr.mxu0 0.0
        %377 = vmatpush2.msra.mxu0 0.0
        %378 = vmatprep.subr.mxu0 0.0
        %379 = vmatpush2.msra.mxu0 0.0
        %380 = vmatprep.subr.mxu0 0.0
        %381 = vmatpush2.msra.mxu0 0.0
        %382 = vmatprep.subr.mxu0 0.0
        %383 = vmatpush2.msra.mxu0 0.0
        %384 = vmatprep.subr.mxu0 0.0
        %385 = vmatpush2.msra.mxu0 0.0
        %386 = vmatprep.subr.mxu0 0.0
        %387 = vmatpush2.msra.mxu0 0.0
        %388 = vmatprep.subr.mxu0 0.0
        %389 = vmatpush2.msra.mxu0 0.0
        %390 = vmatprep.mubr.f32.mxu0 0.0
        %391 = vmatmul.mubr.f32.gmra.mxu0 %v243
        %v392 = vpop.f32.mrf.mxu0
        %v393 = vadd.f32 %v239, %v392
        %v394 = vpop.f32.mrf.mxu0
        %395 = vdwg.mxu0
        %v396 = vmax.f32 %v393, 0.0
        %s397 = scalar_lea.vmem %s230, 8 [#allocation3]
        %398 = vst [vmem:[%s397] sm:$0xff] %v396
        %s399 = sand.u32 %s106, 1
        %s400 = sand.u32 %s106, 1
        %s401 = smul.addr %s400, 16
        %s402 = scalar_lea.vmem [#allocation3], %s401
        // Predicated region
        $region74: #{outconv_relu_forward.1} parent=68 // pred_check
          %p403 = pneg %p116
        $region75: #{outconv_relu_forward.1} parent=68 // pred_check_branch
          %405 = sbr.rel (%p403) target = $region77
        $region76: #{outconv_relu_forward.1} parent=68 // pred_region
          %s406 = smul.u32 2, %s18
          %s407 = smul.addr %s406, 2
          %s408 = sadd.s32 %s19, %s407
          %s409 = smul.addr %s408, 8
          %s410 = scalar_lea.vmem %s3, %s409
          // Predicated region
          $region78: #{outconv_relu_forward.1} parent=76 // pred_check
            _
          $region79: #{outconv_relu_forward.1} parent=76 // pred_check_branch
            %412 = sbr.rel (0) target = $region81
          $region80: #{outconv_relu_forward.1} parent=76 // pred_region
            // Predicated region
            $region82: #{outconv_relu_forward.1} parent=80 // pred_check
              _
            $region83: #{outconv_relu_forward.1} parent=80 // pred_check_branch
              %414 = sbr.rel (0) target = $region85
            $region84: #{outconv_relu_forward.1} parent=80 // pred_region
              // Predicated region
              $region97: #{outconv_relu_forward.1} parent=84 // pred_check
                _
              $region98: #{outconv_relu_forward.1} parent=84 // pred_check_branch
                %432 = sbr.rel (0) target = $region100
              $region99: #{outconv_relu_forward.1} parent=84 // pred_region
                loop: start=0, step=1, limit=1
                $region101: #{outconv_relu_forward.1} parent=99 // loop_pre_header
                  _
                $region102: #{outconv_relu_forward.1} parent=99 // loop_header
                  %s434 = sphi 0, %s438
                  %p435 = scmp.ge.s32.totalorder %s434, 1
                  %s439 = sphi %s402, %s402
                  %s440 = sphi %s410, %s410
                $region103: #{outconv_relu_forward.1} parent=99 // loop_header_branch
                  %437 = sbr.rel (%p435) target = $region107
                $region104: #{outconv_relu_forward.1} parent=99 // loop_body
                  %v441 = vld [vmem:[%s439] sm:$0xff]
                  %442 = vst [vmem:[%s440] sm:$0xff] %v441
                  %v443 = vld [vmem:[%s439 + $0x8] sm:$0xff]
                  %444 = vst [vmem:[%s440 + $0x10] sm:$0xff] %v443
                $region105: #{outconv_relu_forward.1} parent=99 // loop_footer
                  %s438 = sadd.s32 1, %s434
                $region106: #{outconv_relu_forward.1} parent=99 // loop_footer_branch
                  %433 = sbr.rel target = $region102
                $region107: #{outconv_relu_forward.1} parent=99 // loop_exit
                  _
              $region100: #{outconv_relu_forward.1} parent=84 // pred_fallthru
                _
              // Predicated region
              $region108: #{outconv_relu_forward.1} parent=84 // pred_check
                _
              $region109: #{outconv_relu_forward.1} parent=84 // pred_check_branch
                %446 = sbr.rel target = $region111
              $region110: #{outconv_relu_forward.1} parent=84 // pred_region
                _
              $region111: #{outconv_relu_forward.1} parent=84 // pred_fallthru
                _
            $region85: #{outconv_relu_forward.1} parent=80 // pred_fallthru
              _
            // Predicated region
            $region86: #{outconv_relu_forward.1} parent=80 // pred_check
              _
            $region87: #{outconv_relu_forward.1} parent=80 // pred_check_branch
              %416 = sbr.rel target = $region89
            $region88: #{outconv_relu_forward.1} parent=80 // pred_region
              %s418 = ssub.s32 256, 1
              loop: start=0, step=1, limit=1
              $region90: #{outconv_relu_forward.1} parent=88 // loop_pre_header
                _
              $region91: #{outconv_relu_forward.1} parent=88 // loop_header
                %s420 = sphi 0, %s424
                %p421 = scmp.ge.s32.totalorder %s420, 1
                %s425 = sphi %s402, %s402
                %s426 = sphi %s410, %s410
              $region92: #{outconv_relu_forward.1} parent=88 // loop_header_branch
                %423 = sbr.rel (%p421) target = $region96
              $region93: #{outconv_relu_forward.1} parent=88 // loop_body
                %v427 = vld [vmem:[%s425] sm:%s418]
                %428 = vst [vmem:[%s426] sm:%s418] %v427
                %v429 = vld [vmem:[%s425 + $0x8] sm:%s418]
                %430 = vst [vmem:[%s426 + $0x10] sm:%s418] %v429
              $region94: #{outconv_relu_forward.1} parent=88 // loop_footer
                %s424 = sadd.s32 1, %s420
              $region95: #{outconv_relu_forward.1} parent=88 // loop_footer_branch
                %419 = sbr.rel target = $region91
              $region96: #{outconv_relu_forward.1} parent=88 // loop_exit
                _
            $region89: #{outconv_relu_forward.1} parent=80 // pred_fallthru
              _
          $region81: #{outconv_relu_forward.1} parent=76 // pred_fallthru
            _
          %447 = vnop
        $region77: #{outconv_relu_forward.1} parent=68 // pred_fallthru
          _
      $region69: #{outconv_relu_forward.1} parent=5 // pred_fallthru
        _
      %p448 = scmp.le.s32.totalorder 2, %s9
      // Predicated region
      $region112: #{outconv_relu_forward.1} parent=5 // pred_check
        %p449 = pneg %p448
      $region113: #{outconv_relu_forward.1} parent=5 // pred_check_branch
        %451 = sbr.rel (%p449) target = $region115
      $region114: #{outconv_relu_forward.1} parent=5 // pred_region
        %s452 = ssub.s32 %s9, 2
        // Predicated region
        $region116: #{outconv_relu_forward.1} parent=114 // pred_check
          %p453 = pneg %p122
        $region117: #{outconv_relu_forward.1} parent=114 // pred_check_branch
          %455 = sbr.rel (%p453) target = $region119
        $region118: #{outconv_relu_forward.1} parent=114 // pred_region
          %s456 = sand.u32 %s107, 1
          %s457 = sand.u32 %s107, 1
          %s458 = smul.addr %s457, 16
          %s459 = scalar_lea.vmem [#allocation3], %s458
        $region119: #{outconv_relu_forward.1} parent=114 // pred_fallthru
          _
      $region115: #{outconv_relu_forward.1} parent=5 // pred_fallthru
        _
    $region6: #{outconv_relu_forward.1} parent=1 // loop_footer
      %s13 = sadd.s32 1, %s9
    $region7: #{outconv_relu_forward.1} parent=1 // loop_footer_branch
      %8 = sbr.rel target = $region3
    $region8: #{outconv_relu_forward.1} parent=1 // loop_exit
      _

</llo_original>
